<compile_context>
chip_gen: v7x
topology: tpu7x:2x2x1
jax: 0.10.0
libtpu: 0.0.40
codegen_flags: <defaults>
</compile_context>

<pallas_src>
import functools

import jax
import jax.numpy as jnp
from jax.experimental import pallas as pl
from jax.experimental.pallas import tpu as pltpu


def _round_up(x, m):
    return ((x + m - 1) // m) * m


def _cdiv(a, b):
    return (a + b - 1) // b


def _merged_kernel(x_ref, wz_ref, o_ref, *, apply_sigmoid):
    # x_ref: (tm, dobs)   wz_ref: (dobs, tn)   o_ref: (tm, tn)
    acc = jnp.dot(x_ref[...], wz_ref[...], preferred_element_type=jnp.float32)
    if apply_sigmoid:
        acc = jax.nn.sigmoid(acc)       # EUP slot, effectively free
    o_ref[...] = acc.astype(o_ref.dtype)


def _factored_kernel(x_ref, w_ref, zt_ref, o_ref, *, apply_sigmoid):
    # x_ref: (tm, dobs)   w_ref: (dobs, daction)   zt_ref: (daction, tn)
    xw = jnp.dot(x_ref[...], w_ref[...], preferred_element_type=jnp.float32)
    acc = jnp.dot(xw.astype(zt_ref.dtype), zt_ref[...],
                  preferred_element_type=jnp.float32)
    if apply_sigmoid:
        acc = jax.nn.sigmoid(acc)
    o_ref[...] = acc.astype(o_ref.dtype)


def bilinear_forward(Xs, W, Zs, *, apply_sigmoid=False,
                     compute_dtype=jnp.bfloat16, out_dtype=jnp.float32,
                     tm=None, tn=None, use_pallas=None):
    """out = Xs @ W @ Zs.T (optionally followed by sigmoid == preq1)."""
    B, dobs = Xs.shape
    dobs_w, daction = W.shape
    naction, daction_z = Zs.shape
    assert dobs == dobs_w and daction == daction_z

    cdt = jnp.dtype(Xs.dtype) if compute_dtype is None else jnp.dtype(compute_dtype)
    in_bytes = cdt.itemsize
    out_bytes = jnp.dtype(out_dtype).itemsize

    # FLOP guard: fold W @ Zs.T into one (dobs, naction) operand only when the
    # merged form does not massively increase MXU work (it stays mem-bound).
    merged_flops = 2 * B * dobs * naction
    factored_flops = 2 * B * daction * (dobs + naction)
    merged = merged_flops <= 2 * factored_flops

    Xs_c = Xs.astype(cdt)
    if merged:
        # Parameter-sized one-time contraction; rounded to compute dtype
        # (documented tolerance drift vs. the factored PyTorch order).
        WZ = jnp.dot(W, Zs.T, preferred_element_type=jnp.float32).astype(cdt)
    else:
        W_c = W.astype(cdt)
        ZsT = Zs.T.astype(cdt)

    # Small-problem fast path: pallas_call fixed overhead would dominate.
    small = (B * naction) < (1 << 17)
    if use_pallas is False or (use_pallas is None and small):
        if merged:
            out = jnp.dot(Xs_c, WZ, preferred_element_type=jnp.float32)
        else:
            xw = jnp.dot(Xs_c, W_c, preferred_element_type=jnp.float32)
            out = jnp.dot(xw.astype(cdt), ZsT, preferred_element_type=jnp.float32)
        if apply_sigmoid:
            out = jax.nn.sigmoid(out)
        return out.astype(out_dtype)

    # Double-buffered pipeline footprint for one grid step (bytes).
    def footprint(tm_, tn_):
        if merged:
            ins = tm_ * dobs + dobs * tn_
        else:
            ins = tm_ * dobs + dobs * daction + daction * tn_
        return 2 * ins * in_bytes + 2 * tm_ * tn_ * out_bytes

    VMEM_BUDGET = 24 << 20   # comfortably inside v7x's 64 MiB physical VMEM

    if tm is None:
        tm = min(512, _round_up(B, 16))           # 16: bf16 sublane packing
    if tn is None:
        # Keep the whole action dimension resident (parameters fetched once,
        # reused by every batch tile) when it fits; otherwise stream 512-wide
        # lane-dense tiles.
        if footprint(tm, naction) <= VMEM_BUDGET:
            tn = naction
        else:
            tn = min(512, _round_up(naction, 128))

    # Shrink tiles until the double-buffered working set fits.
    while footprint(tm, tn) > VMEM_BUDGET and tm > 16:
        tm = max(16, _round_up(tm // 2, 16))
    while footprint(tm, tn) > VMEM_BUDGET and tn > 128:
        new_tn = max(128, _round_up(tn // 2, 128))
        if new_tn == tn:
            break
        tn = new_tn

    # v7x megacore: avoid a 1x1 grid so both TensorCores get work.
    if _cdiv(B, tm) * _cdiv(naction, tn) == 1 and B >= 32:
        tm = _round_up(_cdiv(B, 2), 16)

    grid = (_cdiv(B, tm), _cdiv(naction, tn))

    if merged:
        kernel = functools.partial(_merged_kernel, apply_sigmoid=apply_sigmoid)
        in_specs = [
            pl.BlockSpec((tm, dobs), lambda i, j: (i, 0)),    # Xs tile
            pl.BlockSpec((dobs, tn), lambda i, j: (0, j)),    # WZ (resident if tn == naction)
        ]
        operands = (Xs_c, WZ)
        param_bytes = dobs * naction * in_bytes
        flops = merged_flops
    else:
        kernel = functools.partial(_factored_kernel, apply_sigmoid=apply_sigmoid)
        in_specs = [
            pl.BlockSpec((tm, dobs), lambda i, j: (i, 0)),       # Xs tile
            pl.BlockSpec((dobs, daction), lambda i, j: (0, 0)),  # W: resident
            pl.BlockSpec((daction, tn), lambda i, j: (0, j)),    # Zs.T tile
        ]
        operands = (Xs_c, W_c, ZsT)
        param_bytes = (dobs * daction + daction * naction) * in_bytes
        flops = factored_flops

    cost = pl.CostEstimate(
        flops=int(flops),
        transcendentals=int(B * naction) if apply_sigmoid else 0,
        bytes_accessed=int(B * dobs * in_bytes + param_bytes
                           + B * naction * out_bytes),
    )
    vmem_limit = int(min(48 << 20, max(32 << 20, 2 * footprint(tm, tn))))

    return pl.pallas_call(
        kernel,
        out_shape=jax.ShapeDtypeStruct((B, naction), out_dtype),
        grid_spec=pl.GridSpec(
            grid=grid,
            in_specs=in_specs,
            out_specs=pl.BlockSpec((tm, tn), lambda i, j: (i, j)),
        ),
        compiler_params=pltpu.CompilerParams(
            dimension_semantics=("parallel", "parallel"),
            vmem_limit_bytes=vmem_limit,
        ),
        cost_estimate=cost,
    )(*operands)


def preq1(logits):
    # Standalone sigmoid, matching the PyTorch module's preq1(); prefer
    # bilinear_forward(..., apply_sigmoid=True) to fuse it into the kernel.
    return jax.nn.sigmoid(logits)


if __name__ == "__main__":
    key = jax.random.PRNGKey(0)
    k1, k2, k3, k4, k5, k6 = jax.random.split(key, 6)

    # ---- Pallas path, merged form (W @ Zs.T folded), ragged tiles ----------
    B, dobs, daction, naction = 390, 48, 32, 600
    Xs = jax.random.normal(k1, (B, dobs), dtype=jnp.float32)
    # Module __init__ uses zeros for W; use a small random init so the output
    # is non-trivial (same parameter shape as the PyTorch module).
    W = jax.random.normal(k2, (dobs, daction), dtype=jnp.float32) * 0.1
    Zs = jax.random.normal(k3, (naction, daction), dtype=jnp.float32)
    ref = Xs @ W @ Zs.T

    out_f32 = bilinear_forward(Xs, W, Zs, compute_dtype=jnp.float32)
    jax.block_until_ready(out_f32)
    assert out_f32.shape == (B, naction)
    assert jnp.allclose(out_f32, ref, atol=5e-2, rtol=2e-2), "merged f32 mismatch"

    out_bf16 = bilinear_forward(Xs, W, Zs)          # default bf16 compute, f32 acc
    jax.block_until_ready(out_bf16)
    assert jnp.allclose(out_bf16, ref, atol=0.4, rtol=0.1), "merged bf16 mismatch"

    out_sig = bilinear_forward(Xs, W, Zs, apply_sigmoid=True,
                               compute_dtype=jnp.float32)
    jax.block_until_ready(out_sig)
    assert jnp.allclose(out_sig, jax.nn.sigmoid(ref), atol=2e-2), "fused sigmoid mismatch"

    # ---- Pallas path, factored form ((Xs @ W) @ Zs.T) — FLOP guard ---------
    B2, dobs2, daction2, naction2 = 390, 256, 16, 600
    Xs2 = jax.random.normal(k4, (B2, dobs2), dtype=jnp.float32)
    W2 = jax.random.normal(k5, (dobs2, daction2), dtype=jnp.float32) * 0.05
    Zs2 = jax.random.normal(k6, (naction2, daction2), dtype=jnp.float32)
    ref2 = Xs2 @ W2 @ Zs2.T
    out2 = bilinear_forward(Xs2, W2, Zs2, compute_dtype=jnp.float32)
    jax.block_until_ready(out2)
    assert out2.shape == (B2, naction2)
    assert jnp.allclose(out2, ref2, atol=5e-2, rtol=2e-2), "factored f32 mismatch"

    # ---- Small-problem fast path (pure XLA, no pallas_call) -----------------
    Bs, naction_s = 10, 200
    Xss = jax.random.normal(k1, (Bs, dobs), dtype=jnp.float32)
    Zss = jax.random.normal(k3, (naction_s, daction), dtype=jnp.float32)
    refs = Xss @ W @ Zss.T
    outs = bilinear_forward(Xss, W, Zss, compute_dtype=jnp.float32)
    jax.block_until_ready(outs)
    assert outs.shape == (Bs, naction_s)
    assert jnp.allclose(outs, refs, atol=5e-2, rtol=2e-2), "fast-path mismatch"

    print("KERNEL_OK")
</pallas_src>

<mosaic_0001>
module attributes {stable_mosaic.version = 11 : i64} {
  func.func @_merged_kernel(%arg0: i32, %arg1: i32, %arg2: memref<208x48xf32, #tpu.memory_space<vmem>>, %arg3: memref<48x600xf32, #tpu.memory_space<vmem>>, %arg4: memref<208x600xf32, #tpu.memory_space<vmem>>) attributes {dimension_semantics = [#tpu.dimension_semantics<parallel>, #tpu.dimension_semantics<parallel>], iteration_bounds = array<i64: 2, 1>, scalar_prefetch = 0 : i64, scratch_operands = 0 : i64, tpu.core_type = #tpu.core_type<tc>, window_params = [{transform_indices = @transform_0, window_bounds = array<i64: 208, 48>}, {transform_indices = @transform_1, window_bounds = array<i64: 48, 600>}, {transform_indices = @transform_2, window_bounds = array<i64: 208, 600>}]} {
    %c0 = arith.constant 0 : index
    %c0_0 = arith.constant 0 : index
    %0 = vector.load %arg2[%c0, %c0_0] : memref<208x48xf32, #tpu.memory_space<vmem>>, vector<208x48xf32>
    %c0_1 = arith.constant 0 : index
    %c0_2 = arith.constant 0 : index
    %1 = vector.load %arg3[%c0_1, %c0_2] : memref<48x600xf32, #tpu.memory_space<vmem>>, vector<48x600xf32>
    %cst = arith.constant dense<0.000000e+00> : vector<208x600xf32>
    %2 = tpu.matmul %0, %1, %cst {dimension_numbers = #tpu.dot_dimension_numbers<[1], [0], [0], [1], [0, 0, 1, 1], [], []>} : vector<208x48xf32>, vector<48x600xf32>, vector<208x600xf32> -> vector<208x600xf32>
    %c0_3 = arith.constant 0 : index
    %c0_4 = arith.constant 0 : index
    %3 = vector.load %arg4[%c0_3, %c0_4] : memref<208x600xf32, #tpu.memory_space<vmem>>, vector<208x600xf32>
    tpu.vector_store %arg4[%c0_3, %c0_4], %2 {strides = array<i32>} : memref<208x600xf32, #tpu.memory_space<vmem>>, vector<208x600xf32>,
    return
  }
  func.func @transform_0(%arg0: i32, %arg1: i32) -> (i32, i32) {
    %c0_i32 = arith.constant 0 : i32
    %c0_i32_0 = arith.constant 0 : i32
    return %arg0, %c0_i32 : i32, i32
  }
  func.func @transform_1(%arg0: i32, %arg1: i32) -> (i32, i32) {
    %c0_i32 = arith.constant 0 : i32
    %c0_i32_0 = arith.constant 0 : i32
    return %c0_i32, %arg1 : i32, i32
  }
  func.func @transform_2(%arg0: i32, %arg1: i32) -> (i32, i32) {
    %c0_i32 = arith.constant 0 : i32
    return %arg0, %arg1 : i32, i32
  }
}

</mosaic_0001>

<llo_original>
// kernel: tpu_custom_call.1
$region0: #{tpu_custom_call.1}
  #allocation0 [shape = 'u32[]', space=smem, size = 0x4, offset = 0x4, fixed_abs, tag = 'smem constant byte address 0x4 - core index']
  #allocation1 [shape = 'u32[144,128]{1,0:T(1,128)}', space=vmem, size = 0x12000, scoped, tag = 'internal scratch']
  %s0 = inlined_call_operand.vmem [shape: f32[390,48], index: 0, kind: input, shape index: {}]
  %s1 = inlined_call_operand.vmem [shape: f32[48,600], index: 1, kind: input, shape index: {}]
  %s2 = inlined_call_operand.hbm [shape: f32[390,600], index: 2, kind: output, shape index: {}]
  %s3 = sld [smem:[#allocation0]]
  $region41: #{tpu_custom_call.1} parent=0
    _
  %s5 = ssub.s32 1, %s3
  %s6 = scalar_select 0, %s5, %s3
  $region1: #{tpu_custom_call.1} parent=0
    #allocation2 [shape = 'u8[1064960]{0}', space=vmem, size = 0x104000, scoped, tag = 'output window, operand 0']
    #allocation3 [shape = 's32[2]{0}', space=sflag, size = 0x8, scoped, tag = 'scoped memory for tpu_custom_call.1']
    %7 = vsyncpa [#allocation3], 0
    %s8 = scalar_lea.sflag [#allocation3], 1
    %9 = vsyncpa %s8, 0
    loop: start=0, step=1, limit=4
    $region2: #{tpu_custom_call.1} parent=1 // loop_pre_header
      _
    $region3: #{tpu_custom_call.1} parent=1 // loop_header
      %s11 = sphi 0, %s15
      %p12 = scmp.ge.s32.totalorder %s11, 4
      %s18 = sphi 0, %s30
      %s19 = sphi 0, %s26
      %s20 = sphi 0, %s18
      %s21 = sphi 0, %s19
      %s22 = sphi 0, %s20
      %s23 = sphi 0, %s21
      %s33 = sphi 0, %s35
      %s36 = sphi 0, %s33
      %s37 = sphi 0, %s36
      %s53 = sphi 0, %s37
      %s59 = sphi 0, %s61
      %s62 = sphi 0, %s59
      %s63 = sphi 0, %s62
      %s79 = sphi 0, %s63
      %s87 = sphi 0, %s89
      %s90 = sphi 0, %s87
      %s91 = sphi 0, %s90
      %s107 = sphi 0, %s91
    $region4: #{tpu_custom_call.1} parent=1 // loop_header_branch
      %14 = sbr.rel (%p12) target = $region8
    $region5: #{tpu_custom_call.1} parent=1 // loop_body
      %s16 = ssub.s32 %s11, 1
      %s17 = ssub.s32 %s11, 2
      %s24 = sadd.s32 1, %s19
      %p25 = scmp.ge.s32.totalorder %s24, 1
      %s26 = scalar_select %p25, 0, %s24
      %s27 = sadd.s32 1, %s18
      %s28 = scalar_select %p25, %s27, %s18
      %p29 = scmp.ge.s32.totalorder %s28, 2
      %s30 = scalar_select %p29, 0, %s28
      %s31 = ssub.s32 %s18, %s30
      %p32 = scmp.eq.s32.totalorder %s31, 0
      %s34 = sadd.s32 %s33, 1
      %s35 = scalar_select %p32, %s33, %s34
      %p38 = pneg %p32
      %p39 = scmp.eq.s32.totalorder %s11, 1
      %p40 = por %p38, %p39
      %p41 = scmp.ne.s32.totalorder %s33, %s36
      %p42 = scmp.eq.s32.totalorder %s11, 0
      %p43 = por %p41, %p42
      %p44 = scmp.ne.s32.totalorder %s33, %s36
      %p45 = scmp.eq.s32.totalorder %s16, 1
      %p46 = por %p44, %p45
      %p47 = scmp.ne.s32.totalorder %s36, %s37
      %p48 = scmp.eq.s32.totalorder %s16, 0
      %p49 = por %p47, %p48
      %p50 = scmp.ne.s32.totalorder %s36, %s37
      %p51 = scmp.eq.s32.totalorder %s17, 1
      %p52 = por %p50, %p51
      %p54 = scmp.ne.s32.totalorder %s37, %s53
      %p55 = scmp.eq.s32.totalorder %s17, 0
      %p56 = por %p54, %p55
      %s57 = ssub.s32 %s19, %s26
      %p58 = scmp.eq.s32.totalorder %s57, 0
      %s60 = sadd.s32 %s59, 1
      %s61 = scalar_select %p58, %s59, %s60
      %p64 = pneg %p58
      %p65 = scmp.eq.s32.totalorder %s11, 1
      %p66 = por %p64, %p65
      %p67 = scmp.ne.s32.totalorder %s59, %s62
      %p68 = scmp.eq.s32.totalorder %s11, 0
      %p69 = por %p67, %p68
      %p70 = scmp.ne.s32.totalorder %s59, %s62
      %p71 = scmp.eq.s32.totalorder %s16, 1
      %p72 = por %p70, %p71
      %p73 = scmp.ne.s32.totalorder %s62, %s63
      %p74 = scmp.eq.s32.totalorder %s16, 0
      %p75 = por %p73, %p74
      %p76 = scmp.ne.s32.totalorder %s62, %s63
      %p77 = scmp.eq.s32.totalorder %s17, 1
      %p78 = por %p76, %p77
      %p80 = scmp.ne.s32.totalorder %s63, %s79
      %p81 = scmp.eq.s32.totalorder %s17, 0
      %p82 = por %p80, %p81
      %s83 = ssub.s32 %s18, %s30
      %s84 = ssub.s32 %s19, %s26
      %s85 = sor.u32 %s83, %s84
      %p86 = scmp.eq.s32.totalorder %s85, 0
      %s88 = sadd.s32 %s87, 1
      %s89 = scalar_select %p86, %s87, %s88
      %p92 = pneg %p86
      %p93 = scmp.eq.s32.totalorder %s11, 1
      %p94 = por %p92, %p93
      %p95 = scmp.ne.s32.totalorder %s87, %s90
      %p96 = scmp.eq.s32.totalorder %s11, 0
      %p97 = por %p95, %p96
      %p98 = scmp.ne.s32.totalorder %s87, %s90
      %p99 = scmp.eq.s32.totalorder %s16, 1
      %p100 = por %p98, %p99
      %p101 = scmp.ne.s32.totalorder %s90, %s91
      %p102 = scmp.eq.s32.totalorder %s16, 0
      %p103 = por %p101, %p102
      %p104 = scmp.ne.s32.totalorder %s90, %s91
      %p105 = scmp.eq.s32.totalorder %s17, 1
      %p106 = por %p104, %p105
      %p108 = scmp.ne.s32.totalorder %s91, %s107
      %p109 = scmp.eq.s32.totalorder %s17, 0
      %p110 = por %p108, %p109
      %p111 = scmp.le.s32.totalorder 1, %s11
      %p112 = scmp.lt.s32.totalorder %s11, 3
      %p113 = pnand %p111, %p112
      %p114 = pneg %p113
      // Predicated region
      $region9: #{tpu_custom_call.1} parent=5 // pred_check
        _
      $region10: #{tpu_custom_call.1} parent=5 // pred_check_branch
        %116 = sbr.rel (%p113) target = $region12
      $region11: #{tpu_custom_call.1} parent=5 // pred_region
        %s117 = ssub.s32 %s11, 1
        // Predicated region
        $region13: #{tpu_custom_call.1} parent=11 // pred_check
          %p118 = pneg %p75
        $region14: #{tpu_custom_call.1} parent=11 // pred_check_branch
          %120 = sbr.rel (%p118) target = $region16
        $region15: #{tpu_custom_call.1} parent=11 // pred_region
          %s121 = smul.u32 5, %s21
          %p122 = scmp.lt.s32.totalorder %s121, 4
          %s123 = scalar_select %p122, %s121, 4
          %s124 = smul.addr %s123, 8
          %s125 = scalar_lea.vmem %s1, %s124
          %s126 = smul.u32 5, %s21
        $region16: #{tpu_custom_call.1} parent=11 // pred_fallthru
          _
      $region12: #{tpu_custom_call.1} parent=5 // pred_fallthru
        _
      %p127 = scmp.lt.s32.totalorder %s11, 2
      // Predicated region
      $region17: #{tpu_custom_call.1} parent=5 // pred_check
        %p128 = pneg %p127
      $region18: #{tpu_custom_call.1} parent=5 // pred_check_branch
        %130 = sbr.rel (%p128) target = $region20
      $region19: #{tpu_custom_call.1} parent=5 // pred_region
        // Predicated region
        $region21: #{tpu_custom_call.1} parent=19 // pred_check
          %p131 = pneg %p43
        $region22: #{tpu_custom_call.1} parent=19 // pred_check_branch
          %133 = sbr.rel (%p131) target = $region24
        $region23: #{tpu_custom_call.1} parent=19 // pred_region
          %s134 = smul.u32 26, %s18
          %s135 = ssub.s32 49, %s134
          %p136 = scmp.lt.s32.totalorder %s135, 26
          %s137 = scalar_select %p136, %s135, 26
          %s138 = smul.u32 128, %s137
          %p139 = scmp.lt.s32.totalorder %s134, 48
          %s140 = scalar_select %p139, %s134, 48
          %s141 = smul.addr %s140, 8
          %s142 = scalar_lea.vmem %s0, %s141
          %s143 = smul.u32 26, %s18
          %s144 = ssub.s32 49, %s143
          %p145 = scmp.lt.s32.totalorder %s144, 26
          %s146 = scalar_select %p145, %s144, 26
          %s147 = smul.u32 128, %s146
        $region24: #{tpu_custom_call.1} parent=19 // pred_fallthru
          _
      $region20: #{tpu_custom_call.1} parent=5 // pred_fallthru
        _
      %p148 = scmp.le.s32.totalorder 1, %s11
      %p149 = scmp.lt.s32.totalorder %s11, 3
      %p150 = pnand %p148, %p149
      %p151 = pneg %p150
      // Predicated region
      $region25: #{tpu_custom_call.1} parent=5 // pred_check
        _
      $region26: #{tpu_custom_call.1} parent=5 // pred_check_branch
        %153 = sbr.rel (%p150) target = $region28
      $region27: #{tpu_custom_call.1} parent=5 // pred_region
        %s154 = ssub.s32 %s11, 1
        %s155 = smul.u32 26, %s20
        %s156 = ssub.s32 49, %s155
        %p157 = scmp.lt.s32.totalorder %s156, 26
        %s158 = scalar_select %p157, %s156, 26
        %s159 = smul.u32 128, %s158
        %p160 = scmp.lt.s32.totalorder %s155, 48
        %s161 = scalar_select %p160, %s155, 48
        %s162 = smul.addr %s161, 8
        %s163 = scalar_lea.vmem %s0, %s162
        %p164 = pneg %p49
        %p165 = pneg %p46
        %s166 = smul.u32 5, %s21
        %p167 = scmp.lt.s32.totalorder %s166, 4
        %s168 = scalar_select %p167, %s166, 4
        %s169 = smul.addr %s168, 8
        %s170 = scalar_lea.vmem %s1, %s169
        %p171 = pneg %p75
        %p172 = pneg %p72
        %p173 = pneg %p103
        %p174 = pneg %p100
        %s175 = sand.u32 %s90, 1
        %s176 = scalar_lea.sflag [#allocation3], %s175
        %s177 = sand.u32 %s90, 1
        %s178 = smul.addr %s177, 1040
        %s179 = scalar_lea.vmem [#allocation2], %s178
        %s180 = smul.u32 26, %s20
        %s181 = ssub.s32 49, %s180
        %p182 = scmp.lt.s32.totalorder %s181, 26
        %s183 = scalar_select %p182, %s181, 26
        %s184 = smul.u32 128, %s183
        %p185 = scmp.lt.s32.totalorder %s180, 48
        %s186 = scalar_select %p185, %s180, 48
        %s187 = smul.addr %s186, 8
        %s188 = scalar_lea.vmem %s0, %s187
        %s189 = smul.u32 26, %s20
        %s190 = ssub.s32 49, %s189
        %p191 = scmp.lt.s32.totalorder %s190, 26
        %s192 = scalar_select %p191, %s190, 26
        %s193 = smul.u32 128, %s192
        %s194 = smul.u32 5, %s21
        %p195 = scmp.lt.s32.totalorder %s194, 4
        %s196 = scalar_select %p195, %s194, 4
        %s197 = smul.addr %s196, 8
        %s198 = scalar_lea.vmem %s1, %s197
        %s199 = smul.u32 5, %s21
        %s200 = smul.u32 26, %s20
        %s201 = smul.u32 5, %s21
        %s202 = ssub.s32 49, %s200
        %p203 = scmp.lt.s32.totalorder %s202, 26
        %s204 = scalar_select %p203, %s202, 26
        %s205 = smul.u32 128, %s204
        %s206 = smul.u32 %s205, 5
        %v207 = vld [vmem:[%s188] sm:$0xff]
        %v208 = vld [vmem:[%s188 + $0x8] sm:$0xff]
        %v209 = vld [vmem:[%s188 + $0x10] sm:$0xff]
        %v210 = vld [vmem:[%s188 + $0x18] sm:$0xff]
        %v211 = vld [vmem:[%s188 + $0x20] sm:$0xff]
        %v212 = vld [vmem:[%s188 + $0x28] sm:$0xff]
        %v213 = vld [vmem:[%s188 + $0x30] sm:$0xff]
        %v214 = vld [vmem:[%s188 + $0x38] sm:$0xff]
        %v215 = vld [vmem:[%s188 + $0x40] sm:$0xff]
        %v216 = vld [vmem:[%s188 + $0x48] sm:$0xff]
        %v217 = vld [vmem:[%s188 + $0x50] sm:$0xff]
        %v218 = vld [vmem:[%s188 + $0x58] sm:$0xff]
        %v219 = vld [vmem:[%s188 + $0x60] sm:$0xff]
        %v220 = vld [vmem:[%s188 + $0x68] sm:$0xff]
        %v221 = vld [vmem:[%s188 + $0x70] sm:$0xff]
        %v222 = vld [vmem:[%s188 + $0x78] sm:$0xff]
        %v223 = vld [vmem:[%s188 + $0x80] sm:$0xff]
        %v224 = vld [vmem:[%s188 + $0x88] sm:$0xff]
        %v225 = vld [vmem:[%s188 + $0x90] sm:$0xff]
        %v226 = vld [vmem:[%s188 + $0x98] sm:$0xff]
        %v227 = vld [vmem:[%s188 + $0xa0] sm:$0xff]
        %v228 = vld [vmem:[%s188 + $0xa8] sm:$0xff]
        %v229 = vld [vmem:[%s188 + $0xb0] sm:$0xff]
        %v230 = vld [vmem:[%s188 + $0xb8] sm:$0xff]
        %v231 = vld [vmem:[%s188 + $0xc0] sm:$0xff]
        %v232 = vld [vmem:[%s188 + $0xc8] sm:$0xff]
        %v233 = vld [vmem:[%s198] sm:$0xff]
        %v234 = vld [vmem:[%s198 + $0x8] sm:$0xff]
        %v235 = vld [vmem:[%s198 + $0x10] sm:$0xff]
        %v236 = vld [vmem:[%s198 + $0x18] sm:$0xff]
        %v237 = vld [vmem:[%s198 + $0x20] sm:$0xff]
        %v238 = vld [vmem:[%s198 + $0x28] sm:$0xff]
        %v239 = vld [vmem:[%s198 + $0x30] sm:$0xff]
        %v240 = vld [vmem:[%s198 + $0x38] sm:$0xff]
        %v241 = vld [vmem:[%s198 + $0x40] sm:$0xff]
        %v242 = vld [vmem:[%s198 + $0x48] sm:$0xff]
        %v243 = vld [vmem:[%s198 + $0x50] sm:$0xff]
        %v244 = vld [vmem:[%s198 + $0x58] sm:$0xff]
        %v245 = vld [vmem:[%s198 + $0x60] sm:$0xff]
        %v246 = vld [vmem:[%s198 + $0x68] sm:$0xff]
        %v247 = vld [vmem:[%s198 + $0x70] sm:$0xff]
        %v248 = vld [vmem:[%s198 + $0x78] sm:$0xff]
        %v249 = vld [vmem:[%s198 + $0x80] sm:$0xff]
        %v250 = vld [vmem:[%s198 + $0x88] sm:$0xff]
        %v251 = vld [vmem:[%s198 + $0x90] sm:$0xff]
        %v252 = vld [vmem:[%s198 + $0x98] sm:$0xff]
        %v253 = vld [vmem:[%s198 + $0xa0] sm:$0xff]
        %v254 = vld [vmem:[%s198 + $0xa8] sm:$0xff]
        %v255 = vld [vmem:[%s198 + $0xb0] sm:$0xff]
        %v256 = vld [vmem:[%s198 + $0xb8] sm:$0xff]
        %v257 = vld [vmem:[%s198 + $0xc0] sm:$0xff]
        %v258 = vld [vmem:[%s198 + $0xc8] sm:$0xff]
        %v259 = vld [vmem:[%s198 + $0xd0] sm:$0xff]
        %v260 = vld [vmem:[%s198 + $0xd8] sm:$0xff]
        %v261 = vld [vmem:[%s198 + $0xe0] sm:$0xff]
        %v262 = vld [vmem:[%s198 + $0xe8] sm:$0xff]
        %vm263 = vcmask 392192
        %v265 = vsel %vm263, %v207, 0
        %v268 = vsel %vm263, %v208, 0
        %v271 = vsel %vm263, %v209, 0
        %v274 = vsel %vm263, %v210, 0
        %v277 = vsel %vm263, %v211, 0
        %v280 = vsel %vm263, %v212, 0
        %v283 = vsel %vm263, %v213, 0
        %v286 = vsel %vm263, %v214, 0
        %v289 = vsel %vm263, %v215, 0
        %v292 = vsel %vm263, %v216, 0
        %v295 = vsel %vm263, %v217, 0
        %v298 = vsel %vm263, %v218, 0
        %v301 = vsel %vm263, %v219, 0
        %v304 = vsel %vm263, %v220, 0
        %v307 = vsel %vm263, %v221, 0
        %v310 = vsel %vm263, %v222, 0
        %v313 = vsel %vm263, %v223, 0
        %v316 = vsel %vm263, %v224, 0
        %v319 = vsel %vm263, %v225, 0
        %v322 = vsel %vm263, %v226, 0
        %v325 = vsel %vm263, %v227, 0
        %v328 = vsel %vm263, %v228, 0
        %v331 = vsel %vm263, %v229, 0
        %v334 = vsel %vm263, %v230, 0
        %v337 = vsel %vm263, %v231, 0
        %v340 = vsel %vm263, %v232, 0
        %342 = vmatprep.subr.mxu0 %v234
        %343 = vmatpush1.msra.mxu0 %v233
        %344 = vmatprep.subr.mxu0 %v239
        %345 = vmatpush1.msra.mxu0 %v238
        %346 = vmatprep.subr.mxu0 %v244
        %347 = vmatpush1.msra.mxu0 %v243
        %348 = vmatprep.subr.mxu0 %v249
        %349 = vmatpush1.msra.mxu0 %v248
        %350 = vmatprep.subr.mxu0 %v254
        %351 = vmatpush1.msra.mxu0 %v253
        %352 = vmatprep.subr.mxu0 %v259
        %353 = vmatpush1.msra.mxu0 %v258
        %354 = vmatprep.subr.mxu0 0.0
        %355 = vmatpush1.msra.mxu0 0.0
        %356 = vmatprep.subr.mxu0 0.0
        %357 = vmatpush1.msra.mxu0 0.0
        %358 = vmatprep.subr.mxu0 0.0
        %359 = vmatpush1.msra.mxu0 0.0
        %360 = vmatprep.subr.mxu0 0.0
        %361 = vmatpush1.msra.mxu0 0.0
        %362 = vmatprep.subr.mxu0 0.0
        %363 = vmatpush1.msra.mxu0 0.0
        %364 = vmatprep.subr.mxu0 0.0
        %365 = vmatpush1.msra.mxu0 0.0
        %366 = vmatprep.subr.mxu0 0.0
        %367 = vmatpush1.msra.mxu0 0.0
        %368 = vmatprep.subr.mxu0 0.0
        %369 = vmatpush1.msra.mxu0 0.0
        %370 = vmatprep.subr.mxu0 0.0
        %371 = vmatpush1.msra.mxu0 0.0
        %372 = vmatprep.subr.mxu0 0.0
        %373 = vmatpush1.msra.mxu0 0.0
        %374 = vmatprep.subr.mxu0 0.0
        %375 = vmatpush1.msra.mxu0 0.0
        %376 = vmatprep.subr.mxu0 0.0
        %377 = vmatpush1.msra.mxu0 0.0
        %378 = vmatprep.subr.mxu0 0.0
        %379 = vmatpush1.msra.mxu0 0.0
        %380 = vmatprep.subr.mxu0 0.0
        %381 = vmatpush1.msra.mxu0 0.0
        %382 = vmatprep.subr.mxu0 0.0
        %383 = vmatpush1.msra.mxu0 0.0
        %384 = vmatprep.subr.mxu0 0.0
        %385 = vmatpush1.msra.mxu0 0.0
        %386 = vmatprep.subr.mxu0 0.0
        %387 = vmatpush1.msra.mxu0 0.0
        %388 = vmatprep.subr.mxu0 0.0
        %389 = vmatpush1.msra.mxu0 0.0
        %390 = vmatprep.subr.mxu0 0.0
        %391 = vmatpush1.msra.mxu0 0.0
        %392 = vmatprep.subr.mxu0 0.0
        %393 = vmatpush1.msra.mxu0 0.0
        %394 = vmatprep.subr.mxu0 0.0
        %395 = vmatpush1.msra.mxu0 0.0
        %396 = vmatprep.subr.mxu0 0.0
        %397 = vmatpush1.msra.mxu0 0.0
        %398 = vmatprep.subr.mxu0 0.0
        %399 = vmatpush1.msra.mxu0 0.0
        %400 = vmatprep.subr.mxu0 0.0
        %401 = vmatpush1.msra.mxu0 0.0
        %402 = vmatprep.subr.mxu0 0.0
        %403 = vmatpush1.msra.mxu0 0.0
        %404 = vmatprep.subr.mxu0 0.0
        %405 = vmatpush1.msra.mxu0 0.0
        %406 = vmatprep.mubr.f32.mxu0 0.0
        %407 = vmatmul.mubr.f32.gmra.mrb[0].mxu0 %v265
        %v408 = vpop.f32.mrb[0].mxu0
        %v409 = vadd.f32 0.0, %v408
        %v410 = vpop.f32.mrb[0].mxu0
        %v411 = vadd.f32 0.0, %v410
        %412 = vmatprep.mubr.f32.mxu0 0.0
        %413 = vmatmul.mubr.f32.gmra.mrb[0].mxu0 %v268
        %v414 = vpop.f32.mrb[0].mxu0
        %v415 = vadd.f32 0.0, %v414
        %v416 = vpop.f32.mrb[0].mxu0
        %v417 = vadd.f32 0.0, %v416
        %418 = vmatprep.mubr.f32.mxu0 0.0
        %419 = vmatmul.mubr.f32.gmra.mrb[0].mxu0 %v271
        %v420 = vpop.f32.mrb[0].mxu0
        %v421 = vadd.f32 0.0, %v420
        %v422 = vpop.f32.mrb[0].mxu0
        %v423 = vadd.f32 0.0, %v422
        %424 = vmatprep.mubr.f32.mxu0 0.0
        %425 = vmatmul.mubr.f32.gmra.mrb[0].mxu0 %v274
        %v426 = vpop.f32.mrb[0].mxu0
        %v427 = vadd.f32 0.0, %v426
        %v428 = vpop.f32.mrb[0].mxu0
        %v429 = vadd.f32 0.0, %v428
        %430 = vmatprep.mubr.f32.mxu0 0.0
        %431 = vmatmul.mubr.f32.gmra.mrb[0].mxu0 %v277
        %v432 = vpop.f32.mrb[0].mxu0
        %v433 = vadd.f32 0.0, %v432
        %v434 = vpop.f32.mrb[0].mxu0
        %v435 = vadd.f32 0.0, %v434
        %436 = vmatprep.mubr.f32.mxu0 0.0
        %437 = vmatmul.mubr.f32.gmra.mrb[0].mxu0 %v280
        %v438 = vpop.f32.mrb[0].mxu0
        %v439 = vadd.f32 0.0, %v438
        %v440 = vpop.f32.mrb[0].mxu0
        %v441 = vadd.f32 0.0, %v440
        %442 = vmatprep.mubr.f32.mxu0 0.0
        %443 = vmatmul.mubr.f32.gmra.mrb[0].mxu0 %v283
        %v444 = vpop.f32.mrb[0].mxu0
        %v445 = vadd.f32 0.0, %v444
        %v446 = vpop.f32.mrb[0].mxu0
        %v447 = vadd.f32 0.0, %v446
        %448 = vmatprep.mubr.f32.mxu0 0.0
        %449 = vmatmul.mubr.f32.gmra.mrb[0].mxu0 %v286
        %v450 = vpop.f32.mrb[0].mxu0
        %v451 = vadd.f32 0.0, %v450
        %v452 = vpop.f32.mrb[0].mxu0
        %v453 = vadd.f32 0.0, %v452
        %454 = vmatprep.mubr.f32.mxu0 0.0
        %455 = vmatmul.mubr.f32.gmra.mrb[0].mxu0 %v289
        %v456 = vpop.f32.mrb[0].mxu0
        %v457 = vadd.f32 0.0, %v456
        %v458 = vpop.f32.mrb[0].mxu0
        %v459 = vadd.f32 0.0, %v458
        %460 = vmatprep.mubr.f32.mxu0 0.0
        %461 = vmatmul.mubr.f32.gmra.mrb[0].mxu0 %v292
        %v462 = vpop.f32.mrb[0].mxu0
        %v463 = vadd.f32 0.0, %v462
        %v464 = vpop.f32.mrb[0].mxu0
        %v465 = vadd.f32 0.0, %v464
        %466 = vmatprep.mubr.f32.mxu0 0.0
        %467 = vmatmul.mubr.f32.gmra.mrb[0].mxu0 %v295
        %v468 = vpop.f32.mrb[0].mxu0
        %v469 = vadd.f32 0.0, %v468
        %v470 = vpop.f32.mrb[0].mxu0
        %v471 = vadd.f32 0.0, %v470
        %472 = vmatprep.mubr.f32.mxu0 0.0
        %473 = vmatmul.mubr.f32.gmra.mrb[0].mxu0 %v298
        %v474 = vpop.f32.mrb[0].mxu0
        %v475 = vadd.f32 0.0, %v474
        %v476 = vpop.f32.mrb[0].mxu0
        %v477 = vadd.f32 0.0, %v476
        %478 = vmatprep.mubr.f32.mxu0 0.0
        %479 = vmatmul.mubr.f32.gmra.mrb[0].mxu0 %v301
        %v480 = vpop.f32.mrb[0].mxu0
        %v481 = vadd.f32 0.0, %v480
        %v482 = vpop.f32.mrb[0].mxu0
        %v483 = vadd.f32 0.0, %v482
        %484 = vmatprep.mubr.f32.mxu0 0.0
        %485 = vmatmul.mubr.f32.gmra.mrb[0].mxu0 %v304
        %v486 = vpop.f32.mrb[0].mxu0
        %v487 = vadd.f32 0.0, %v486
        %v488 = vpop.f32.mrb[0].mxu0
        %v489 = vadd.f32 0.0, %v488
        %490 = vmatprep.mubr.f32.mxu0 0.0
        %491 = vmatmul.mubr.f32.gmra.mrb[0].mxu0 %v307
        %v492 = vpop.f32.mrb[0].mxu0
        %v493 = vadd.f32 0.0, %v492
        %v494 = vpop.f32.mrb[0].mxu0
        %v495 = vadd.f32 0.0, %v494
        %496 = vmatprep.mubr.f32.mxu0 0.0
        %497 = vmatmul.mubr.f32.gmra.mrb[0].mxu0 %v310
        %v498 = vpop.f32.mrb[0].mxu0
        %v499 = vadd.f32 0.0, %v498
        %v500 = vpop.f32.mrb[0].mxu0
        %v501 = vadd.f32 0.0, %v500
        %502 = vmatprep.mubr.f32.mxu0 0.0
        %503 = vmatmul.mubr.f32.gmra.mrb[0].mxu0 %v313
        %v504 = vpop.f32.mrb[0].mxu0
        %v505 = vadd.f32 0.0, %v504
        %v506 = vpop.f32.mrb[0].mxu0
        %v507 = vadd.f32 0.0, %v506
        %508 = vmatprep.mubr.f32.mxu0 0.0
        %509 = vmatmul.mubr.f32.gmra.mrb[0].mxu0 %v316
        %v510 = vpop.f32.mrb[0].mxu0
        %v511 = vadd.f32 0.0, %v510
        %v512 = vpop.f32.mrb[0].mxu0
        %v513 = vadd.f32 0.0, %v512
        %514 = vmatprep.mubr.f32.mxu0 0.0
        %515 = vmatmul.mubr.f32.gmra.mrb[0].mxu0 %v319
        %v516 = vpop.f32.mrb[0].mxu0
        %v517 = vadd.f32 0.0, %v516
        %v518 = vpop.f32.mrb[0].mxu0
        %v519 = vadd.f32 0.0, %v518
        %520 = vmatprep.mubr.f32.mxu0 0.0
        %521 = vmatmul.mubr.f32.gmra.mrb[0].mxu0 %v322
        %v522 = vpop.f32.mrb[0].mxu0
        %v523 = vadd.f32 0.0, %v522
        %v524 = vpop.f32.mrb[0].mxu0
        %v525 = vadd.f32 0.0, %v524
        %526 = vmatprep.mubr.f32.mxu0 0.0
        %527 = vmatmul.mubr.f32.gmra.mrb[0].mxu0 %v325
        %v528 = vpop.f32.mrb[0].mxu0
        %v529 = vadd.f32 0.0, %v528
        %v530 = vpop.f32.mrb[0].mxu0
        %v531 = vadd.f32 0.0, %v530
        %532 = vmatprep.mubr.f32.mxu0 0.0
        %533 = vmatmul.mubr.f32.gmra.mrb[0].mxu0 %v328
        %v534 = vpop.f32.mrb[0].mxu0
        %v535 = vadd.f32 0.0, %v534
        %v536 = vpop.f32.mrb[0].mxu0
        %v537 = vadd.f32 0.0, %v536
        %538 = vmatprep.mubr.f32.mxu0 0.0
        %539 = vmatmul.mubr.f32.gmra.mrb[0].mxu0 %v331
        %v540 = vpop.f32.mrb[0].mxu0
        %v541 = vadd.f32 0.0, %v540
        %v542 = vpop.f32.mrb[0].mxu0
        %v543 = vadd.f32 0.0, %v542
        %544 = vmatprep.mubr.f32.mxu0 0.0
        %545 = vmatmul.mubr.f32.gmra.mrb[0].mxu0 %v334
        %v546 = vpop.f32.mrb[0].mxu0
        %v547 = vadd.f32 0.0, %v546
        %v548 = vpop.f32.mrb[0].mxu0
        %v549 = vadd.f32 0.0, %v548
        %550 = vmatprep.mubr.f32.mxu0 0.0
        %551 = vmatmul.mubr.f32.gmra.mrb[0].mxu0 %v337
        %v552 = vpop.f32.mrb[0].mxu0
        %v553 = vadd.f32 0.0, %v552
        %v554 = vpop.f32.mrb[0].mxu0
        %v555 = vadd.f32 0.0, %v554
        %556 = vmatprep.mubr.f32.mxu0 0.0
        %557 = vmatmul.mubr.f32.gmra.mrb[0].mxu0 %v340
        %v558 = vpop.f32.mrb[0].mxu0
        %v559 = vadd.f32 0.0, %v558
        %v560 = vpop.f32.mrb[0].mxu0
        %v561 = vadd.f32 0.0, %v560
        %562 = vdwg.mxu0
        %563 = vmatprep.subr.mxu0 %v236
        %564 = vmatpush1.msra.mxu0 %v235
        %565 = vmatprep.subr.mxu0 %v241
        %566 = vmatpush1.msra.mxu0 %v240
        %567 = vmatprep.subr.mxu0 %v246
        %568 = vmatpush1.msra.mxu0 %v245
        %569 = vmatprep.subr.mxu0 %v251
        %570 = vmatpush1.msra.mxu0 %v250
        %571 = vmatprep.subr.mxu0 %v256
        %572 = vmatpush1.msra.mxu0 %v255
        %573 = vmatprep.subr.mxu0 %v261
        %574 = vmatpush1.msra.mxu0 %v260
        %575 = vmatprep.subr.mxu0 0.0
        %576 = vmatpush1.msra.mxu0 0.0
        %577 = vmatprep.subr.mxu0 0.0
        %578 = vmatpush1.msra.mxu0 0.0
        %579 = vmatprep.subr.mxu0 0.0
        %580 = vmatpush1.msra.mxu0 0.0
        %581 = vmatprep.subr.mxu0 0.0
        %582 = vmatpush1.msra.mxu0 0.0
        %583 = vmatprep.subr.mxu0 0.0
        %584 = vmatpush1.msra.mxu0 0.0
        %585 = vmatprep.subr.mxu0 0.0
        %586 = vmatpush1.msra.mxu0 0.0
        %587 = vmatprep.subr.mxu0 0.0
        %588 = vmatpush1.msra.mxu0 0.0
        %589 = vmatprep.subr.mxu0 0.0
        %590 = vmatpush1.msra.mxu0 0.0
        %591 = vmatprep.subr.mxu0 0.0
        %592 = vmatpush1.msra.mxu0 0.0
        %593 = vmatprep.subr.mxu0 0.0
        %594 = vmatpush1.msra.mxu0 0.0
        %595 = vmatprep.subr.mxu0 0.0
        %596 = vmatpush1.msra.mxu0 0.0
        %597 = vmatprep.subr.mxu0 0.0
        %598 = vmatpush1.msra.mxu0 0.0
        %599 = vmatprep.subr.mxu0 0.0
        %600 = vmatpush1.msra.mxu0 0.0
        %601 = vmatprep.subr.mxu0 0.0
        %602 = vmatpush1.msra.mxu0 0.0
        %603 = vmatprep.subr.mxu0 0.0
        %604 = vmatpush1.msra.mxu0 0.0
        %605 = vmatprep.subr.mxu0 0.0
        %606 = vmatpush1.msra.mxu0 0.0
        %607 = vmatprep.subr.mxu0 0.0
        %608 = vmatpush1.msra.mxu0 0.0
        %609 = vmatprep.subr.mxu0 0.0
        %610 = vmatpush1.msra.mxu0 0.0
        %611 = vmatprep.subr.mxu0 0.0
        %612 = vmatpush1.msra.mxu0 0.0
        %613 = vmatprep.subr.mxu0 0.0
        %614 = vmatpush1.msra.mxu0 0.0
        %615 = vmatprep.subr.mxu0 0.0
        %616 = vmatpush1.msra.mxu0 0.0
        %617 = vmatprep.subr.mxu0 0.0
        %618 = vmatpush1.msra.mxu0 0.0
        %619 = vmatprep.subr.mxu0 0.0
        %620 = vmatpush1.msra.mxu0 0.0
        %621 = vmatprep.subr.mxu0 0.0
        %622 = vmatpush1.msra.mxu0 0.0
        %623 = vmatprep.subr.mxu0 0.0
        %624 = vmatpush1.msra.mxu0 0.0
        %625 = vmatprep.subr.mxu0 0.0
        %626 = vmatpush1.msra.mxu0 0.0
        %627 = vmatprep.mubr.f32.mxu0 0.0
        %628 = vmatmul.mubr.f32.gmra.mrb[0].mxu0 %v265
        %v629 = vpop.f32.mrb[0].mxu0
        %v630 = vadd.f32 0.0, %v629
        %v631 = vpop.f32.mrb[0].mxu0
        %v632 = vadd.f32 0.0, %v631
        %633 = vmatprep.mubr.f32.mxu0 0.0
        %634 = vmatmul.mubr.f32.gmra.mrb[0].mxu0 %v268
        %v635 = vpop.f32.mrb[0].mxu0
        %v636 = vadd.f32 0.0, %v635
        %v637 = vpop.f32.mrb[0].mxu0
        %v638 = vadd.f32 0.0, %v637
        %639 = vmatprep.mubr.f32.mxu0 0.0
        %640 = vmatmul.mubr.f32.gmra.mrb[0].mxu0 %v271
        %v641 = vpop.f32.mrb[0].mxu0
        %v642 = vadd.f32 0.0, %v641
        %v643 = vpop.f32.mrb[0].mxu0
        %v644 = vadd.f32 0.0, %v643
        %645 = vmatprep.mubr.f32.mxu0 0.0
        %646 = vmatmul.mubr.f32.gmra.mrb[0].mxu0 %v274
        %v647 = vpop.f32.mrb[0].mxu0
        %v648 = vadd.f32 0.0, %v647
        %v649 = vpop.f32.mrb[0].mxu0
        %v650 = vadd.f32 0.0, %v649
        %651 = vmatprep.mubr.f32.mxu0 0.0
        %652 = vmatmul.mubr.f32.gmra.mrb[0].mxu0 %v277
        %v653 = vpop.f32.mrb[0].mxu0
        %v654 = vadd.f32 0.0, %v653
        %v655 = vpop.f32.mrb[0].mxu0
        %v656 = vadd.f32 0.0, %v655
        %657 = vmatprep.mubr.f32.mxu0 0.0
        %658 = vmatmul.mubr.f32.gmra.mrb[0].mxu0 %v280
        %v659 = vpop.f32.mrb[0].mxu0
        %v660 = vadd.f32 0.0, %v659
        %v661 = vpop.f32.mrb[0].mxu0
        %v662 = vadd.f32 0.0, %v661
        %663 = vmatprep.mubr.f32.mxu0 0.0
        %664 = vmatmul.mubr.f32.gmra.mrb[0].mxu0 %v283
        %v665 = vpop.f32.mrb[0].mxu0
        %v666 = vadd.f32 0.0, %v665
        %v667 = vpop.f32.mrb[0].mxu0
        %v668 = vadd.f32 0.0, %v667
        %669 = vmatprep.mubr.f32.mxu0 0.0
        %670 = vmatmul.mubr.f32.gmra.mrb[0].mxu0 %v286
        %v671 = vpop.f32.mrb[0].mxu0
        %v672 = vadd.f32 0.0, %v671
        %v673 = vpop.f32.mrb[0].mxu0
        %v674 = vadd.f32 0.0, %v673
        %675 = vmatprep.mubr.f32.mxu0 0.0
        %676 = vmatmul.mubr.f32.gmra.mrb[0].mxu0 %v289
        %v677 = vpop.f32.mrb[0].mxu0
        %v678 = vadd.f32 0.0, %v677
        %v679 = vpop.f32.mrb[0].mxu0
        %v680 = vadd.f32 0.0, %v679
        %681 = vmatprep.mubr.f32.mxu0 0.0
        %682 = vmatmul.mubr.f32.gmra.mrb[0].mxu0 %v292
        %v683 = vpop.f32.mrb[0].mxu0
        %v684 = vadd.f32 0.0, %v683
        %v685 = vpop.f32.mrb[0].mxu0
        %v686 = vadd.f32 0.0, %v685
        %687 = vmatprep.mubr.f32.mxu0 0.0
        %688 = vmatmul.mubr.f32.gmra.mrb[0].mxu0 %v295
        %v689 = vpop.f32.mrb[0].mxu0
        %v690 = vadd.f32 0.0, %v689
        %v691 = vpop.f32.mrb[0].mxu0
        %v692 = vadd.f32 0.0, %v691
        %693 = vmatprep.mubr.f32.mxu0 0.0
        %694 = vmatmul.mubr.f32.gmra.mrb[0].mxu0 %v298
        %v695 = vpop.f32.mrb[0].mxu0
        %v696 = vadd.f32 0.0, %v695
        %v697 = vpop.f32.mrb[0].mxu0
        %v698 = vadd.f32 0.0, %v697
        %699 = vmatprep.mubr.f32.mxu0 0.0
        %700 = vmatmul.mubr.f32.gmra.mrb[0].mxu0 %v301
        %v701 = vpop.f32.mrb[0].mxu0
        %v702 = vadd.f32 0.0, %v701
        %v703 = vpop.f32.mrb[0].mxu0
        %v704 = vadd.f32 0.0, %v703
        %705 = vmatprep.mubr.f32.mxu0 0.0
        %706 = vmatmul.mubr.f32.gmra.mrb[0].mxu0 %v304
        %v707 = vpop.f32.mrb[0].mxu0
        %v708 = vadd.f32 0.0, %v707
        %v709 = vpop.f32.mrb[0].mxu0
        %v710 = vadd.f32 0.0, %v709
        %711 = vmatprep.mubr.f32.mxu0 0.0
        %712 = vmatmul.mubr.f32.gmra.mrb[0].mxu0 %v307
        %v713 = vpop.f32.mrb[0].mxu0
        %v714 = vadd.f32 0.0, %v713
        %v715 = vpop.f32.mrb[0].mxu0
        %v716 = vadd.f32 0.0, %v715
        %717 = vmatprep.mubr.f32.mxu0 0.0
        %718 = vmatmul.mubr.f32.gmra.mrb[0].mxu0 %v310
        %v719 = vpop.f32.mrb[0].mxu0
        %v720 = vadd.f32 0.0, %v719
        %v721 = vpop.f32.mrb[0].mxu0
        %v722 = vadd.f32 0.0, %v721
        %723 = vmatprep.mubr.f32.mxu0 0.0
        %724 = vmatmul.mubr.f32.gmra.mrb[0].mxu0 %v313
        %v725 = vpop.f32.mrb[0].mxu0
        %v726 = vadd.f32 0.0, %v725
        %v727 = vpop.f32.mrb[0].mxu0
        %v728 = vadd.f32 0.0, %v727
        %729 = vmatprep.mubr.f32.mxu0 0.0
        %730 = vmatmul.mubr.f32.gmra.mrb[0].mxu0 %v316
        %v731 = vpop.f32.mrb[0].mxu0
        %v732 = vadd.f32 0.0, %v731
        %v733 = vpop.f32.mrb[0].mxu0
        %v734 = vadd.f32 0.0, %v733
        %735 = vmatprep.mubr.f32.mxu0 0.0
        %736 = vmatmul.mubr.f32.gmra.mrb[0].mxu0 %v319
        %v737 = vpop.f32.mrb[0].mxu0
        %v738 = vadd.f32 0.0, %v737
        %v739 = vpop.f32.mrb[0].mxu0
        %v740 = vadd.f32 0.0, %v739
        %741 = vmatprep.mubr.f32.mxu0 0.0
        %742 = vmatmul.mubr.f32.gmra.mrb[0].mxu0 %v322
        %v743 = vpop.f32.mrb[0].mxu0
        %v744 = vadd.f32 0.0, %v743
        %v745 = vpop.f32.mrb[0].mxu0
        %v746 = vadd.f32 0.0, %v745
        %747 = vmatprep.mubr.f32.mxu0 0.0
        %748 = vmatmul.mubr.f32.gmra.mrb[0].mxu0 %v325
        %v749 = vpop.f32.mrb[0].mxu0
        %v750 = vadd.f32 0.0, %v749
        %v751 = vpop.f32.mrb[0].mxu0
        %v752 = vadd.f32 0.0, %v751
        %753 = vmatprep.mubr.f32.mxu0 0.0
        %754 = vmatmul.mubr.f32.gmra.mrb[0].mxu0 %v328
        %v755 = vpop.f32.mrb[0].mxu0
        %v756 = vadd.f32 0.0, %v755
        %v757 = vpop.f32.mrb[0].mxu0
        %v758 = vadd.f32 0.0, %v757
        %759 = vmatprep.mubr.f32.mxu0 0.0
        %760 = vmatmul.mubr.f32.gmra.mrb[0].mxu0 %v331
        %v761 = vpop.f32.mrb[0].mxu0
        %v762 = vadd.f32 0.0, %v761
        %v763 = vpop.f32.mrb[0].mxu0
        %v764 = vadd.f32 0.0, %v763
        %765 = vmatprep.mubr.f32.mxu0 0.0
        %766 = vmatmul.mubr.f32.gmra.mrb[0].mxu0 %v334
        %v767 = vpop.f32.mrb[0].mxu0
        %v768 = vadd.f32 0.0, %v767
        %v769 = vpop.f32.mrb[0].mxu0
        %v770 = vadd.f32 0.0, %v769
        %771 = vmatprep.mubr.f32.mxu0 0.0
        %772 = vmatmul.mubr.f32.gmra.mrb[0].mxu0 %v337
        %v773 = vpop.f32.mrb[0].mxu0
        %v774 = vadd.f32 0.0, %v773
        %v775 = vpop.f32.mrb[0].mxu0
        %v776 = vadd.f32 0.0, %v775
        %777 = vmatprep.mubr.f32.mxu0 0.0
        %778 = vmatmul.mubr.f32.gmra.mrb[0].mxu0 %v340
        %v779 = vpop.f32.mrb[0].mxu0
        %v780 = vadd.f32 0.0, %v779
        %v781 = vpop.f32.mrb[0].mxu0
        %v782 = vadd.f32 0.0, %v781
        %783 = vdwg.mxu0
        %784 = vmatprep.subr.mxu0 0.0
        %785 = vmatpush1.msra.mxu0 %v237
        %786 = vmatprep.subr.mxu0 0.0
        %787 = vmatpush1.msra.mxu0 %v242
        %788 = vmatprep.subr.mxu0 0.0
        %789 = vmatpush1.msra.mxu0 %v247
        %790 = vmatprep.subr.mxu0 0.0
        %791 = vmatpush1.msra.mxu0 %v252
        %792 = vmatprep.subr.mxu0 0.0
        %793 = vmatpush1.msra.mxu0 %v257
        %794 = vmatprep.subr.mxu0 0.0
        %795 = vmatpush1.msra.mxu0 %v262
        %796 = vmatprep.subr.mxu0 0.0
        %797 = vmatpush1.msra.mxu0 0.0
        %798 = vmatprep.subr.mxu0 0.0
        %799 = vmatpush1.msra.mxu0 0.0
        %800 = vmatprep.subr.mxu0 0.0
        %801 = vmatpush1.msra.mxu0 0.0
        %802 = vmatprep.subr.mxu0 0.0
        %803 = vmatpush1.msra.mxu0 0.0
        %804 = vmatprep.subr.mxu0 0.0
        %805 = vmatpush1.msra.mxu0 0.0
        %806 = vmatprep.subr.mxu0 0.0
        %807 = vmatpush1.msra.mxu0 0.0
        %808 = vmatprep.subr.mxu0 0.0
        %809 = vmatpush1.msra.mxu0 0.0
        %810 = vmatprep.subr.mxu0 0.0
        %811 = vmatpush1.msra.mxu0 0.0
        %812 = vmatprep.subr.mxu0 0.0
        %813 = vmatpush1.msra.mxu0 0.0
        %814 = vmatprep.subr.mxu0 0.0
        %815 = vmatpush1.msra.mxu0 0.0
        %816 = vmatprep.subr.mxu0 0.0
        %817 = vmatpush1.msra.mxu0 0.0
        %818 = vmatprep.subr.mxu0 0.0
        %819 = vmatpush1.msra.mxu0 0.0
        %820 = vmatprep.subr.mxu0 0.0
        %821 = vmatpush1.msra.mxu0 0.0
        %822 = vmatprep.subr.mxu0 0.0
        %823 = vmatpush1.msra.mxu0 0.0
        %824 = vmatprep.subr.mxu0 0.0
        %825 = vmatpush1.msra.mxu0 0.0
        %826 = vmatprep.subr.mxu0 0.0
        %827 = vmatpush1.msra.mxu0 0.0
        %828 = vmatprep.subr.mxu0 0.0
        %829 = vmatpush1.msra.mxu0 0.0
        %830 = vmatprep.subr.mxu0 0.0
        %831 = vmatpush1.msra.mxu0 0.0
        %832 = vmatprep.subr.mxu0 0.0
        %833 = vmatpush1.msra.mxu0 0.0
        %834 = vmatprep.subr.mxu0 0.0
        %835 = vmatpush1.msra.mxu0 0.0
        %836 = vmatprep.subr.mxu0 0.0
        %837 = vmatpush1.msra.mxu0 0.0
        %838 = vmatprep.subr.mxu0 0.0
        %839 = vmatpush1.msra.mxu0 0.0
        %840 = vmatprep.subr.mxu0 0.0
        %841 = vmatpush1.msra.mxu0 0.0
        %842 = vmatprep.subr.mxu0 0.0
        %843 = vmatpush1.msra.mxu0 0.0
        %844 = vmatprep.subr.mxu0 0.0
        %845 = vmatpush1.msra.mxu0 0.0
        %846 = vmatprep.subr.mxu0 0.0
        %847 = vmatpush1.msra.mxu0 0.0
        %848 = vmatprep.mubr.f32.mxu0 0.0
        %849 = vmatmul.mubr.f32.gmra.mrb[0].mxu0 %v265
        %v850 = vpop.f32.mrb[0].mxu0
        %v851 = vadd.f32 0.0, %v850
        %v852 = vpop.f32.mrb[0].mxu0
        %853 = vmatprep.mubr.f32.mxu0 0.0
        %854 = vmatmul.mubr.f32.gmra.mrb[0].mxu0 %v268
        %v855 = vpop.f32.mrb[0].mxu0
        %v856 = vadd.f32 0.0, %v855
        %v857 = vpop.f32.mrb[0].mxu0
        %858 = vmatprep.mubr.f32.mxu0 0.0
        %859 = vmatmul.mubr.f32.gmra.mrb[0].mxu0 %v271
        %v860 = vpop.f32.mrb[0].mxu0
        %v861 = vadd.f32 0.0, %v860
        %v862 = vpop.f32.mrb[0].mxu0
        %863 = vmatprep.mubr.f32.mxu0 0.0
        %864 = vmatmul.mubr.f32.gmra.mrb[0].mxu0 %v274
        %v865 = vpop.f32.mrb[0].mxu0
        %v866 = vadd.f32 0.0, %v865
        %v867 = vpop.f32.mrb[0].mxu0
        %868 = vmatprep.mubr.f32.mxu0 0.0
        %869 = vmatmul.mubr.f32.gmra.mrb[0].mxu0 %v277
        %v870 = vpop.f32.mrb[0].mxu0
        %v871 = vadd.f32 0.0, %v870
        %v872 = vpop.f32.mrb[0].mxu0
        %873 = vmatprep.mubr.f32.mxu0 0.0
        %874 = vmatmul.mubr.f32.gmra.mrb[0].mxu0 %v280
        %v875 = vpop.f32.mrb[0].mxu0
        %v876 = vadd.f32 0.0, %v875
        %v877 = vpop.f32.mrb[0].mxu0
        %878 = vmatprep.mubr.f32.mxu0 0.0
        %879 = vmatmul.mubr.f32.gmra.mrb[0].mxu0 %v283
        %v880 = vpop.f32.mrb[0].mxu0
        %v881 = vadd.f32 0.0, %v880
        %v882 = vpop.f32.mrb[0].mxu0
        %883 = vmatprep.mubr.f32.mxu0 0.0
        %884 = vmatmul.mubr.f32.gmra.mrb[0].mxu0 %v286
        %v885 = vpop.f32.mrb[0].mxu0
        %v886 = vadd.f32 0.0, %v885
        %v887 = vpop.f32.mrb[0].mxu0
        %888 = vmatprep.mubr.f32.mxu0 0.0
        %889 = vmatmul.mubr.f32.gmra.mrb[0].mxu0 %v289
        %v890 = vpop.f32.mrb[0].mxu0
        %v891 = vadd.f32 0.0, %v890
        %v892 = vpop.f32.mrb[0].mxu0
        %893 = vmatprep.mubr.f32.mxu0 0.0
        %894 = vmatmul.mubr.f32.gmra.mrb[0].mxu0 %v292
        %v895 = vpop.f32.mrb[0].mxu0
        %v896 = vadd.f32 0.0, %v895
        %v897 = vpop.f32.mrb[0].mxu0
        %898 = vmatprep.mubr.f32.mxu0 0.0
        %899 = vmatmul.mubr.f32.gmra.mrb[0].mxu0 %v295
        %v900 = vpop.f32.mrb[0].mxu0
        %v901 = vadd.f32 0.0, %v900
        %v902 = vpop.f32.mrb[0].mxu0
        %903 = vmatprep.mubr.f32.mxu0 0.0
        %904 = vmatmul.mubr.f32.gmra.mrb[0].mxu0 %v298
        %v905 = vpop.f32.mrb[0].mxu0
        %v906 = vadd.f32 0.0, %v905
        %v907 = vpop.f32.mrb[0].mxu0
        %908 = vmatprep.mubr.f32.mxu0 0.0
        %909 = vmatmul.mubr.f32.gmra.mrb[0].mxu0 %v301
        %v910 = vpop.f32.mrb[0].mxu0
        %v911 = vadd.f32 0.0, %v910
        %v912 = vpop.f32.mrb[0].mxu0
        %913 = vmatprep.mubr.f32.mxu0 0.0
        %914 = vmatmul.mubr.f32.gmra.mrb[0].mxu0 %v304
        %v915 = vpop.f32.mrb[0].mxu0
        %v916 = vadd.f32 0.0, %v915
        %v917 = vpop.f32.mrb[0].mxu0
        %918 = vmatprep.mubr.f32.mxu0 0.0
        %919 = vmatmul.mubr.f32.gmra.mrb[0].mxu0 %v307
        %v920 = vpop.f32.mrb[0].mxu0
        %v921 = vadd.f32 0.0, %v920
        %v922 = vpop.f32.mrb[0].mxu0
        %923 = vmatprep.mubr.f32.mxu0 0.0
        %924 = vmatmul.mubr.f32.gmra.mrb[0].mxu0 %v310
        %v925 = vpop.f32.mrb[0].mxu0
        %v926 = vadd.f32 0.0, %v925
        %v927 = vpop.f32.mrb[0].mxu0
        %928 = vmatprep.mubr.f32.mxu0 0.0
        %929 = vmatmul.mubr.f32.gmra.mrb[0].mxu0 %v313
        %v930 = vpop.f32.mrb[0].mxu0
        %v931 = vadd.f32 0.0, %v930
        %v932 = vpop.f32.mrb[0].mxu0
        %933 = vmatprep.mubr.f32.mxu0 0.0
        %934 = vmatmul.mubr.f32.gmra.mrb[0].mxu0 %v316
        %v935 = vpop.f32.mrb[0].mxu0
        %v936 = vadd.f32 0.0, %v935
        %v937 = vpop.f32.mrb[0].mxu0
        %938 = vmatprep.mubr.f32.mxu0 0.0
        %939 = vmatmul.mubr.f32.gmra.mrb[0].mxu0 %v319
        %v940 = vpop.f32.mrb[0].mxu0
        %v941 = vadd.f32 0.0, %v940
        %v942 = vpop.f32.mrb[0].mxu0
        %943 = vmatprep.mubr.f32.mxu0 0.0
        %944 = vmatmul.mubr.f32.gmra.mrb[0].mxu0 %v322
        %v945 = vpop.f32.mrb[0].mxu0
        %v946 = vadd.f32 0.0, %v945
        %v947 = vpop.f32.mrb[0].mxu0
        %948 = vmatprep.mubr.f32.mxu0 0.0
        %949 = vmatmul.mubr.f32.gmra.mrb[0].mxu0 %v325
        %v950 = vpop.f32.mrb[0].mxu0
        %v951 = vadd.f32 0.0, %v950
        %v952 = vpop.f32.mrb[0].mxu0
        %953 = vmatprep.mubr.f32.mxu0 0.0
        %954 = vmatmul.mubr.f32.gmra.mrb[0].mxu0 %v328
        %v955 = vpop.f32.mrb[0].mxu0
        %v956 = vadd.f32 0.0, %v955
        %v957 = vpop.f32.mrb[0].mxu0
        %958 = vmatprep.mubr.f32.mxu0 0.0
        %959 = vmatmul.mubr.f32.gmra.mrb[0].mxu0 %v331
        %v960 = vpop.f32.mrb[0].mxu0
        %v961 = vadd.f32 0.0, %v960
        %v962 = vpop.f32.mrb[0].mxu0
        %963 = vmatprep.mubr.f32.mxu0 0.0
        %964 = vmatmul.mubr.f32.gmra.mrb[0].mxu0 %v334
        %v965 = vpop.f32.mrb[0].mxu0
        %v966 = vadd.f32 0.0, %v965
        %v967 = vpop.f32.mrb[0].mxu0
        %968 = vmatprep.mubr.f32.mxu0 0.0
        %969 = vmatmul.mubr.f32.gmra.mrb[0].mxu0 %v337
        %v970 = vpop.f32.mrb[0].mxu0
        %v971 = vadd.f32 0.0, %v970
        %v972 = vpop.f32.mrb[0].mxu0
        %973 = vmatprep.mubr.f32.mxu0 0.0
        %974 = vmatmul.mubr.f32.gmra.mrb[0].mxu0 %v340
        %v975 = vpop.f32.mrb[0].mxu0
        %v976 = vadd.f32 0.0, %v975
        %v977 = vpop.f32.mrb[0].mxu0
        %978 = vdwg.mxu0
        %979 = vst [vmem:[%s179] sm:$0xff] %v409
        %980 = vst [vmem:[%s179 + $0x8] sm:$0xff] %v411
        %981 = vst [vmem:[%s179 + $0x10] sm:$0xff] %v630
        %982 = vst [vmem:[%s179 + $0x18] sm:$0xff] %v632
        %vm983 = vcmask 719872
        %984 = vst.msk [vmem:[%s179 + $0x20] sm:$0xff] %vm983, %v851
        %985 = vst [vmem:[%s179 + $0x28] sm:$0xff] %v415
        %986 = vst [vmem:[%s179 + $0x30] sm:$0xff] %v417
        %987 = vst [vmem:[%s179 + $0x38] sm:$0xff] %v636
        %988 = vst [vmem:[%s179 + $0x40] sm:$0xff] %v638
        %989 = vst.msk [vmem:[%s179 + $0x48] sm:$0xff] %vm983, %v856
        %990 = vst [vmem:[%s179 + $0x50] sm:$0xff] %v421
        %991 = vst [vmem:[%s179 + $0x58] sm:$0xff] %v423
        %992 = vst [vmem:[%s179 + $0x60] sm:$0xff] %v642
        %993 = vst [vmem:[%s179 + $0x68] sm:$0xff] %v644
        %994 = vst.msk [vmem:[%s179 + $0x70] sm:$0xff] %vm983, %v861
        %995 = vst [vmem:[%s179 + $0x78] sm:$0xff] %v427
        %996 = vst [vmem:[%s179 + $0x80] sm:$0xff] %v429
        %997 = vst [vmem:[%s179 + $0x88] sm:$0xff] %v648
        %998 = vst [vmem:[%s179 + $0x90] sm:$0xff] %v650
        %999 = vst.msk [vmem:[%s179 + $0x98] sm:$0xff] %vm983, %v866
        %1000 = vst [vmem:[%s179 + $0xa0] sm:$0xff] %v433
        %1001 = vst [vmem:[%s179 + $0xa8] sm:$0xff] %v435
        %1002 = vst [vmem:[%s179 + $0xb0] sm:$0xff] %v654
        %1003 = vst [vmem:[%s179 + $0xb8] sm:$0xff] %v656
        %1004 = vst.msk [vmem:[%s179 + $0xc0] sm:$0xff] %vm983, %v871
        %1005 = vst [vmem:[%s179 + $0xc8] sm:$0xff] %v439
        %1006 = vst [vmem:[%s179 + $0xd0] sm:$0xff] %v441
        %1007 = vst [vmem:[%s179 + $0xd8] sm:$0xff] %v660
        %1008 = vst [vmem:[%s179 + $0xe0] sm:$0xff] %v662
        %1009 = vst.msk [vmem:[%s179 + $0xe8] sm:$0xff] %vm983, %v876
        %1010 = vst [vmem:[%s179 + $0xf0] sm:$0xff] %v445
        %1011 = vst [vmem:[%s179 + $0xf8] sm:$0xff] %v447
        %1012 = vst [vmem:[%s179 + $0x100] sm:$0xff] %v666
        %1013 = vst [vmem:[%s179 + $0x108] sm:$0xff] %v668
        %1014 = vst.msk [vmem:[%s179 + $0x110] sm:$0xff] %vm983, %v881
        %1015 = vst [vmem:[%s179 + $0x118] sm:$0xff] %v451
        %1016 = vst [vmem:[%s179 + $0x120] sm:$0xff] %v453
        %1017 = vst [vmem:[%s179 + $0x128] sm:$0xff] %v672
        %1018 = vst [vmem:[%s179 + $0x130] sm:$0xff] %v674
        %1019 = vst.msk [vmem:[%s179 + $0x138] sm:$0xff] %vm983, %v886
        %1020 = vst [vmem:[%s179 + $0x140] sm:$0xff] %v457
        %1021 = vst [vmem:[%s179 + $0x148] sm:$0xff] %v459
        %1022 = vst [vmem:[%s179 + $0x150] sm:$0xff] %v678
        %1023 = vst [vmem:[%s179 + $0x158] sm:$0xff] %v680
        %1024 = vst.msk [vmem:[%s179 + $0x160] sm:$0xff] %vm983, %v891
        %1025 = vst [vmem:[%s179 + $0x168] sm:$0xff] %v463
        %1026 = vst [vmem:[%s179 + $0x170] sm:$0xff] %v465
        %1027 = vst [vmem:[%s179 + $0x178] sm:$0xff] %v684
        %1028 = vst [vmem:[%s179 + $0x180] sm:$0xff] %v686
        %1029 = vst.msk [vmem:[%s179 + $0x188] sm:$0xff] %vm983, %v896
        %1030 = vst [vmem:[%s179 + $0x190] sm:$0xff] %v469
        %1031 = vst [vmem:[%s179 + $0x198] sm:$0xff] %v471
        %1032 = vst [vmem:[%s179 + $0x1a0] sm:$0xff] %v690
        %1033 = vst [vmem:[%s179 + $0x1a8] sm:$0xff] %v692
        %1034 = vst.msk [vmem:[%s179 + $0x1b0] sm:$0xff] %vm983, %v901
        %1035 = vst [vmem:[%s179 + $0x1b8] sm:$0xff] %v475
        %1036 = vst [vmem:[%s179 + $0x1c0] sm:$0xff] %v477
        %1037 = vst [vmem:[%s179 + $0x1c8] sm:$0xff] %v696
        %1038 = vst [vmem:[%s179 + $0x1d0] sm:$0xff] %v698
        %1039 = vst.msk [vmem:[%s179 + $0x1d8] sm:$0xff] %vm983, %v906
        %1040 = vst [vmem:[%s179 + $0x1e0] sm:$0xff] %v481
        %1041 = vst [vmem:[%s179 + $0x1e8] sm:$0xff] %v483
        %1042 = vst [vmem:[%s179 + $0x1f0] sm:$0xff] %v702
        %1043 = vst [vmem:[%s179 + $0x1f8] sm:$0xff] %v704
        %1044 = vst.msk [vmem:[%s179 + $0x200] sm:$0xff] %vm983, %v911
        %1045 = vst [vmem:[%s179 + $0x208] sm:$0xff] %v487
        %1046 = vst [vmem:[%s179 + $0x210] sm:$0xff] %v489
        %1047 = vst [vmem:[%s179 + $0x218] sm:$0xff] %v708
        %1048 = vst [vmem:[%s179 + $0x220] sm:$0xff] %v710
        %1049 = vst.msk [vmem:[%s179 + $0x228] sm:$0xff] %vm983, %v916
        %1050 = vst [vmem:[%s179 + $0x230] sm:$0xff] %v493
        %1051 = vst [vmem:[%s179 + $0x238] sm:$0xff] %v495
        %1052 = vst [vmem:[%s179 + $0x240] sm:$0xff] %v714
        %1053 = vst [vmem:[%s179 + $0x248] sm:$0xff] %v716
        %1054 = vst.msk [vmem:[%s179 + $0x250] sm:$0xff] %vm983, %v921
        %1055 = vst [vmem:[%s179 + $0x258] sm:$0xff] %v499
        %1056 = vst [vmem:[%s179 + $0x260] sm:$0xff] %v501
        %1057 = vst [vmem:[%s179 + $0x268] sm:$0xff] %v720
        %1058 = vst [vmem:[%s179 + $0x270] sm:$0xff] %v722
        %1059 = vst.msk [vmem:[%s179 + $0x278] sm:$0xff] %vm983, %v926
        %1060 = vst [vmem:[%s179 + $0x280] sm:$0xff] %v505
        %1061 = vst [vmem:[%s179 + $0x288] sm:$0xff] %v507
        %1062 = vst [vmem:[%s179 + $0x290] sm:$0xff] %v726
        %1063 = vst [vmem:[%s179 + $0x298] sm:$0xff] %v728
        %1064 = vst.msk [vmem:[%s179 + $0x2a0] sm:$0xff] %vm983, %v931
        %1065 = vst [vmem:[%s179 + $0x2a8] sm:$0xff] %v511
        %1066 = vst [vmem:[%s179 + $0x2b0] sm:$0xff] %v513
        %1067 = vst [vmem:[%s179 + $0x2b8] sm:$0xff] %v732
        %1068 = vst [vmem:[%s179 + $0x2c0] sm:$0xff] %v734
        %1069 = vst.msk [vmem:[%s179 + $0x2c8] sm:$0xff] %vm983, %v936
        %1070 = vst [vmem:[%s179 + $0x2d0] sm:$0xff] %v517
        %1071 = vst [vmem:[%s179 + $0x2d8] sm:$0xff] %v519
        %1072 = vst [vmem:[%s179 + $0x2e0] sm:$0xff] %v738
        %1073 = vst [vmem:[%s179 + $0x2e8] sm:$0xff] %v740
        %1074 = vst.msk [vmem:[%s179 + $0x2f0] sm:$0xff] %vm983, %v941
        %1075 = vst [vmem:[%s179 + $0x2f8] sm:$0xff] %v523
        %1076 = vst [vmem:[%s179 + $0x300] sm:$0xff] %v525
        %1077 = vst [vmem:[%s179 + $0x308] sm:$0xff] %v744
        %1078 = vst [vmem:[%s179 + $0x310] sm:$0xff] %v746
        %1079 = vst.msk [vmem:[%s179 + $0x318] sm:$0xff] %vm983, %v946
        %1080 = vst [vmem:[%s179 + $0x320] sm:$0xff] %v529
        %1081 = vst [vmem:[%s179 + $0x328] sm:$0xff] %v531
        %1082 = vst [vmem:[%s179 + $0x330] sm:$0xff] %v750
        %1083 = vst [vmem:[%s179 + $0x338] sm:$0xff] %v752
        %1084 = vst.msk [vmem:[%s179 + $0x340] sm:$0xff] %vm983, %v951
        %1085 = vst [vmem:[%s179 + $0x348] sm:$0xff] %v535
        %1086 = vst [vmem:[%s179 + $0x350] sm:$0xff] %v537
        %1087 = vst [vmem:[%s179 + $0x358] sm:$0xff] %v756
        %1088 = vst [vmem:[%s179 + $0x360] sm:$0xff] %v758
        %1089 = vst.msk [vmem:[%s179 + $0x368] sm:$0xff] %vm983, %v956
        %1090 = vst [vmem:[%s179 + $0x370] sm:$0xff] %v541
        %1091 = vst [vmem:[%s179 + $0x378] sm:$0xff] %v543
        %1092 = vst [vmem:[%s179 + $0x380] sm:$0xff] %v762
        %1093 = vst [vmem:[%s179 + $0x388] sm:$0xff] %v764
        %1094 = vst.msk [vmem:[%s179 + $0x390] sm:$0xff] %vm983, %v961
        %1095 = vst [vmem:[%s179 + $0x398] sm:$0xff] %v547
        %1096 = vst [vmem:[%s179 + $0x3a0] sm:$0xff] %v549
        %1097 = vst [vmem:[%s179 + $0x3a8] sm:$0xff] %v768
        %1098 = vst [vmem:[%s179 + $0x3b0] sm:$0xff] %v770
        %1099 = vst.msk [vmem:[%s179 + $0x3b8] sm:$0xff] %vm983, %v966
        %1100 = vst [vmem:[%s179 + $0x3c0] sm:$0xff] %v553
        %1101 = vst [vmem:[%s179 + $0x3c8] sm:$0xff] %v555
        %1102 = vst [vmem:[%s179 + $0x3d0] sm:$0xff] %v774
        %1103 = vst [vmem:[%s179 + $0x3d8] sm:$0xff] %v776
        %1104 = vst.msk [vmem:[%s179 + $0x3e0] sm:$0xff] %vm983, %v971
        %1105 = vst [vmem:[%s179 + $0x3e8] sm:$0xff] %v559
        %1106 = vst [vmem:[%s179 + $0x3f0] sm:$0xff] %v561
        %1107 = vst [vmem:[%s179 + $0x3f8] sm:$0xff] %v780
        %1108 = vst [vmem:[%s179 + $0x400] sm:$0xff] %v782
        %1109 = vst.msk [vmem:[%s179 + $0x408] sm:$0xff] %vm983, %v976
        %s1110 = sand.u32 %s90, 1
        %s1111 = scalar_lea.sflag [#allocation3], %s1110
        %s1112 = sand.u32 %s90, 1
        %s1113 = smul.addr %s1112, 1040
        %s1114 = scalar_lea.vmem [#allocation2], %s1113
        // Predicated region
        $region29: #{tpu_custom_call.1} parent=27 // pred_check
          %p1115 = pneg %p100
        $region30: #{tpu_custom_call.1} parent=27 // pred_check_branch
          %1117 = sbr.rel (%p1115) target = $region32
        $region31: #{tpu_custom_call.1} parent=27 // pred_region
          %s1118 = smul.u32 26, %s20
          %s1119 = smul.u32 5, %s21
          %s1120 = ssub.s32 49, %s1118
          %p1121 = scmp.lt.s32.totalorder %s1120, 26
          %s1122 = scalar_select %p1121, %s1120, 26
          %s1123 = smul.u32 128, %s1122
          %s1124 = smul.u32 %s1123, 5
          %s1126 = ssub.s32 16640, %s1124
          %1127 = vsyncadd %s1111, %s1126
          %p1128 = scmp.ne.s32.totalorder 0, %s1124
          %s1129 = smul.addr %s1118, 5
          %s1130 = sadd.s32 %s1119, %s1129
          %s1131 = smul.addr %s1130, 128
          %s1132 = scalar_lea.hbm %s2, %s1131
          %s1133 = smul.u32 40, %s1122
          %s1134 = sshll.u32 %s1114, 4
          %s1135 = int_to_ptr.vmem [resolvable:$true] %s1134
          %s1136 = sshll.u32 %s1133, 4
          %1140 = dma.vmem_to_hbm [thread:$0]  (%p1128), %s1135, %s1136, %s1132, %s1111, 640, 640, 40
        $region32: #{tpu_custom_call.1} parent=27 // pred_fallthru
          _
      $region28: #{tpu_custom_call.1} parent=5 // pred_fallthru
        _
      %p1141 = scmp.le.s32.totalorder 2, %s11
      // Predicated region
      $region33: #{tpu_custom_call.1} parent=5 // pred_check
        %p1142 = pneg %p1141
      $region34: #{tpu_custom_call.1} parent=5 // pred_check_branch
        %1144 = sbr.rel (%p1142) target = $region36
      $region35: #{tpu_custom_call.1} parent=5 // pred_region
        %s1145 = ssub.s32 %s11, 2
        // Predicated region
        $region37: #{tpu_custom_call.1} parent=35 // pred_check
          %p1146 = pneg %p106
        $region38: #{tpu_custom_call.1} parent=35 // pred_check_branch
          %1148 = sbr.rel (%p1146) target = $region40
        $region39: #{tpu_custom_call.1} parent=35 // pred_region
          %s1149 = sand.u32 %s91, 1
          %s1150 = scalar_lea.sflag [#allocation3], %s1149
          %s1151 = sand.u32 %s91, 1
          %s1152 = smul.addr %s1151, 1040
          %s1153 = scalar_lea.vmem [#allocation2], %s1152
          %1154 = dma.done %s1150, 16640
        $region40: #{tpu_custom_call.1} parent=35 // pred_fallthru
          _
      $region36: #{tpu_custom_call.1} parent=5 // pred_fallthru
        _
    $region6: #{tpu_custom_call.1} parent=1 // loop_footer
      %s15 = sadd.s32 1, %s11
    $region7: #{tpu_custom_call.1} parent=1 // loop_footer_branch
      %10 = sbr.rel target = $region3
    $region8: #{tpu_custom_call.1} parent=1 // loop_exit
      _
    %1155 = vsyncpa [#allocation3], 1
    %s1156 = scalar_lea.sflag [#allocation3], 1
    %1157 = vsyncpa %s1156, 1

</llo_original>
